<compile_context>
chip_gen: v5e
topology: v5e:2x2
jax: 0.10.0
libtpu: 0.0.40
codegen_flags: <defaults>
</compile_context>

<pallas_src>
import functools
import math

import jax
import jax.numpy as jnp
from jax.experimental import pallas as pl
from jax.experimental.pallas import tpu as pltpu


def _round_up(x, m):
    return (x + m - 1) // m * m


def _rope_kernel(posoff_ref, inv_ref, phase_ref, out_ref, *, k):
    """Writes one (TR, L) lane-dense tile of the refolded (sin|cos) table.

    Refolded element (r, c) corresponds to sequence position p = r*k + c//dim
    and feature index d = c % dim; its value is
        cos(p * inv_full[d] + phase[d])   with phase = -pi/2 on the sin half.

    posoff_ref: (1, L) int32  = c // dim
    inv_ref   : (1, L) f32    = inv_full[c % dim]
    phase_ref : (1, L) f32    = phase[c % dim]
    """
    tr, width = out_ref.shape
    i = pl.program_id(0)
    # Exact integer sequence positions, generated lane-dense on the VPU.
    row = jax.lax.broadcasted_iota(jnp.int32, (tr, width), 0) + i * tr
    pos = (row * k + posoff_ref[...]).astype(jnp.float32)          # (tr, L)
    out_ref[...] = jnp.cos(pos * inv_ref[...] + phase_ref[...])


def llama_rotary_embedding(x, dim, *, base=10000.0, seq_len=None, tile_rows=512):
    """Pallas equivalent of LlamaRotaryEmbedding.forward.

    x: any array whose axis 1 is the sequence length (only its shape is used,
       matching the PyTorch module). Returns float32 (1, seq_len, 1, dim).
    """
    if seq_len is None:
        seq_len = x.shape[1]
    assert dim % 2 == 0, "dim must be even (cat(sin, cos) layout)"
    half = dim // 2

    # Lane-dense refold: view the (seq_len, dim) table as (rows, L) with
    # L = lcm(dim, 128); k consecutive sequence positions share one row.
    k = 128 // math.gcd(dim, 128)
    L = k * dim

    rows_needed = pl.cdiv(seq_len, k)
    if rows_needed <= tile_rows:
        tr = max(8, _round_up(rows_needed, 8))
        rows_padded = tr
    else:
        tr = tile_rows
        rows_padded = _round_up(rows_needed, tr)
    grid = (rows_padded // tr,)

    # Small (1, L) constants; constant index_map keeps them VMEM-resident
    # across every grid step (no re-DMA).
    inv_freq = 1.0 / (base ** (jnp.arange(0, dim, 2, dtype=jnp.float32) / dim))
    inv_full = jnp.concatenate([inv_freq, inv_freq])                       # (dim,)
    phase = jnp.concatenate(
        [jnp.full((half,), -jnp.pi / 2, dtype=jnp.float32),
         jnp.zeros((half,), dtype=jnp.float32)])                           # (dim,)
    inv_row = jnp.tile(inv_full, k).reshape(1, L)
    phase_row = jnp.tile(phase, k).reshape(1, L)
    posoff_row = (jnp.arange(L, dtype=jnp.int32) // dim).reshape(1, L)

    const_spec = pl.BlockSpec((1, L), lambda i: (0, 0))
    refolded = pl.pallas_call(
        functools.partial(_rope_kernel, k=k),
        out_shape=jax.ShapeDtypeStruct((rows_padded, L), jnp.float32),
        grid=grid,
        in_specs=[const_spec, const_spec, const_spec],
        out_specs=pl.BlockSpec((tr, L), lambda i: (i, 0)),
        compiler_params=pltpu.CompilerParams(
            dimension_semantics=("parallel",)),
    )(posoff_row, inv_row, phase_row)

    # Contiguous row-major refold back to (seq, dim); trim any pad rows.
    emb = refolded.reshape(rows_padded * k, dim)[:seq_len]
    return emb[None, :, None, :]


def _reference(x, dim, base=10000.0, seq_len=None):
    if seq_len is None:
        seq_len = x.shape[1]
    inv_freq = 1.0 / (base ** (jnp.arange(0, dim, 2, dtype=jnp.float32) / dim))
    pos = jnp.arange(seq_len, dtype=jnp.float32)
    sincos = jnp.einsum("i,j->ij", pos, inv_freq)
    emb = jnp.concatenate([jnp.sin(sincos), jnp.cos(sincos)], axis=-1)
    return emb[None, :, None, :]


if __name__ == "__main__":
    # config-like params (synthetic, deterministic)
    dim = 32           # head_dim
    base = 10000.0     # rope_theta
    batch, seq, heads = 2, 8, 4

    key = jax.random.PRNGKey(0)
    # x only contributes its shape (axis 1 = seq_len) and dtype/device.
    x = jax.random.normal(key, (batch, seq, heads, dim), dtype=jnp.float32)

    out = jax.block_until_ready(llama_rotary_embedding(x, dim, base=base))
    ref = _reference(x, dim, base=base)
    assert out.shape == (1, seq, 1, dim), out.shape
    assert out.dtype == jnp.float32
    assert jnp.allclose(out, ref, atol=1e-5, rtol=1e-5), float(
        jnp.max(jnp.abs(out - ref)))

    # seq_len not a multiple of the refold factor exercises pad + trim path.
    out2 = jax.block_until_ready(
        llama_rotary_embedding(x, dim, base=base, seq_len=5))
    ref2 = _reference(x, dim, base=base, seq_len=5)
    assert out2.shape == (1, 5, 1, dim), out2.shape
    assert jnp.allclose(out2, ref2, atol=1e-5, rtol=1e-5)

    print("KERNEL_OK")
</pallas_src>

<mosaic_0001>
module attributes {stable_mosaic.version = 11 : i64} {
  func.func @_rope_kernel(%arg0: i32, %arg1: memref<1x128xi32, #tpu.memory_space<vmem>>, %arg2: memref<1x128xf32, #tpu.memory_space<vmem>>, %arg3: memref<1x128xf32, #tpu.memory_space<vmem>>, %arg4: memref<8x128xf32, #tpu.memory_space<vmem>>) attributes {dimension_semantics = [#tpu.dimension_semantics<parallel>], iteration_bounds = array<i64: 1>, scalar_prefetch = 0 : i64, scratch_operands = 0 : i64, tpu.core_type = #tpu.core_type<tc>, window_params = [{pipeline_mode = #tpu.pipeline_mode<synchronous>, transform_indices = @transform_0, window_bounds = array<i64: 1, 128>}, {pipeline_mode = #tpu.pipeline_mode<synchronous>, transform_indices = @transform_1, window_bounds = array<i64: 1, 128>}, {pipeline_mode = #tpu.pipeline_mode<synchronous>, transform_indices = @transform_2, window_bounds = array<i64: 1, 128>}, {transform_indices = @transform_3, window_bounds = array<i64: 8, 128>}]} {
    %0 = tpu.iota {dimensions = array<i32: 0>} : vector<8x128xi32>
    %c8_i32 = arith.constant 8 : i32
    %1 = arith.muli %arg0, %c8_i32 : i32
    %2 = vector.broadcast %1 : i32 to vector<8x128xi32>
    %3 = arith.addi %0, %2 : vector<8x128xi32>
    %c4_i32 = arith.constant 4 : i32
    %4 = vector.broadcast %c4_i32 : i32 to vector<8x128xi32>
    %5 = arith.muli %3, %4 : vector<8x128xi32>
    %c0 = arith.constant 0 : index
    %c0_0 = arith.constant 0 : index
    %6 = vector.load %arg1[%c0, %c0_0] : memref<1x128xi32, #tpu.memory_space<vmem>>, vector<1x128xi32>
    %7 = vector.broadcast %6 : vector<1x128xi32> to vector<8x128xi32>
    %8 = arith.addi %5, %7 : vector<8x128xi32>
    %9 = arith.sitofp %8 : vector<8x128xi32> to vector<8x128xf32>
    %c0_1 = arith.constant 0 : index
    %c0_2 = arith.constant 0 : index
    %10 = vector.load %arg2[%c0_1, %c0_2] : memref<1x128xf32, #tpu.memory_space<vmem>>, vector<1x128xf32>
    %11 = vector.broadcast %10 : vector<1x128xf32> to vector<8x128xf32>
    %12 = arith.mulf %9, %11 : vector<8x128xf32>
    %c0_3 = arith.constant 0 : index
    %c0_4 = arith.constant 0 : index
    %13 = vector.load %arg3[%c0_3, %c0_4] : memref<1x128xf32, #tpu.memory_space<vmem>>, vector<1x128xf32>
    %14 = vector.broadcast %13 : vector<1x128xf32> to vector<8x128xf32>
    %15 = arith.addf %12, %14 : vector<8x128xf32>
    %16 = math.cos %15 : vector<8x128xf32>
    %c0_5 = arith.constant 0 : index
    %c0_6 = arith.constant 0 : index
    %17 = vector.load %arg4[%c0_5, %c0_6] : memref<8x128xf32, #tpu.memory_space<vmem>>, vector<8x128xf32>
    tpu.vector_store %arg4[%c0_5, %c0_6], %16 {strides = array<i32>} : memref<8x128xf32, #tpu.memory_space<vmem>>, vector<8x128xf32>,
    return
  }
  func.func @transform_0(%arg0: i32) -> (i32, i32) {
    %c0_i32 = arith.constant 0 : i32
    %c0_i32_0 = arith.constant 0 : i32
    %c0_i32_1 = arith.constant 0 : i32
    return %c0_i32, %c0_i32_0 : i32, i32
  }
  func.func @transform_1(%arg0: i32) -> (i32, i32) {
    %c0_i32 = arith.constant 0 : i32
    %c0_i32_0 = arith.constant 0 : i32
    %c0_i32_1 = arith.constant 0 : i32
    return %c0_i32, %c0_i32_0 : i32, i32
  }
  func.func @transform_2(%arg0: i32) -> (i32, i32) {
    %c0_i32 = arith.constant 0 : i32
    %c0_i32_0 = arith.constant 0 : i32
    %c0_i32_1 = arith.constant 0 : i32
    return %c0_i32, %c0_i32_0 : i32, i32
  }
  func.func @transform_3(%arg0: i32) -> (i32, i32) {
    %c0_i32 = arith.constant 0 : i32
    %c0_i32_0 = arith.constant 0 : i32
    return %arg0, %c0_i32 : i32, i32
  }
}

</mosaic_0001>

<llo_original>
// kernel: tpu_custom_call.1
$region0: #{tpu_custom_call.1}
  #allocation0 [shape = 'u32[]', space=smem, size = 0x4, offset = 0x4, fixed_abs, tag = 'smem constant byte address 0x4 - core index']
  #allocation1 [shape = 'u32[72,128]{1,0:T(1,128)}', space=vmem, size = 0x9000, scoped, tag = 'internal scratch']
  %s0 = inlined_call_operand.hbm [shape: s32[1,128], index: 0, kind: input, shape index: {}]
  %s1 = inlined_call_operand.hbm [shape: f32[1,128], index: 1, kind: input, shape index: {}]
  %s2 = inlined_call_operand.vmem [shape: f32[1,128], index: 2, kind: input, shape index: {}]
  %s3 = inlined_call_operand.hbm [shape: f32[8,128], index: 3, kind: output, shape index: {}]
  %s4 = sld [smem:[#allocation0]]
  $region30: #{tpu_custom_call.1} parent=0
    _
  %s6 = ssub.s32 1, %s4
  %s7 = scalar_select 0, %s6, %s4
  $region1: #{tpu_custom_call.1} parent=0
    #allocation2 [shape = 'u8[512]{0}', space=vmem, size = 0x400, scoped, tag = 'input window, operand 0, single buffered']
    #allocation3 [shape = 's32[1]{0}', space=sflag, size = 0x4, scoped, tag = 'scoped memory for tpu_custom_call.1']
    #allocation4 [shape = 's32[1]{0}', space=sflag, size = 0x4, scoped, tag = 'scoped memory for tpu_custom_call.1']
    #allocation5 [shape = 'u8[512]{0}', space=vmem, size = 0x400, scoped, tag = 'input window, operand 1, single buffered']
    #allocation6 [shape = 's32[1]{0}', space=sflag, size = 0x4, scoped, tag = 'scoped memory for tpu_custom_call.1']
    #allocation7 [shape = 'u8[4096]{0}', space=vmem, size = 0x1000, scoped, tag = 'output window, operand 0, single buffered']
    %8 = vsyncpa [#allocation3], 0
    %9 = vsyncpa [#allocation6], 0
    %10 = vsyncpa [#allocation4], 0
    // Predicated region
    $region2: #{tpu_custom_call.1} parent=1 // pred_check
      _
    $region3: #{tpu_custom_call.1} parent=1 // pred_check_branch
      %12 = sbr.rel (0) target = $region5
    $region4: #{tpu_custom_call.1} parent=1 // pred_region
      %14 = vsyncadd [#allocation3], 0
      %s16 = sshll.u32 %s0, 4
      %s17 = int_to_ptr.hbm [resolvable:$true] %s16
      %s18 = sshll.u32 [#allocation2], 4
      %s19 = int_to_ptr.vmem [resolvable:$true] %s18
      %21 = dma.hbm_to_vmem [thread:$0]  %s17, 16, %s19, [#allocation3]
    $region5: #{tpu_custom_call.1} parent=1 // pred_fallthru
      _
    // Predicated region
    $region6: #{tpu_custom_call.1} parent=1 // pred_check
      _
    $region7: #{tpu_custom_call.1} parent=1 // pred_check_branch
      %23 = sbr.rel (0) target = $region9
    $region8: #{tpu_custom_call.1} parent=1 // pred_region
      %25 = vsyncadd [#allocation6], 0
      %s27 = sshll.u32 %s1, 4
      %s28 = int_to_ptr.hbm [resolvable:$true] %s27
      %s29 = sshll.u32 [#allocation5], 4
      %s30 = int_to_ptr.vmem [resolvable:$true] %s29
      %32 = dma.hbm_to_vmem [thread:$0]  %s28, 16, %s30, [#allocation6]
    $region9: #{tpu_custom_call.1} parent=1 // pred_fallthru
      _
    // Predicated region
    $region10: #{tpu_custom_call.1} parent=1 // pred_check
      _
    $region11: #{tpu_custom_call.1} parent=1 // pred_check_branch
      %34 = sbr.rel (0) target = $region13
    $region12: #{tpu_custom_call.1} parent=1 // pred_region
      _
    $region13: #{tpu_custom_call.1} parent=1 // pred_fallthru
      _
    // Predicated region
    $region14: #{tpu_custom_call.1} parent=1 // pred_check
      _
    $region15: #{tpu_custom_call.1} parent=1 // pred_check_branch
      %36 = sbr.rel (0) target = $region17
    $region16: #{tpu_custom_call.1} parent=1 // pred_region
      %38 = dma.done [#allocation3], 16
    $region17: #{tpu_custom_call.1} parent=1 // pred_fallthru
      _
    // Predicated region
    $region18: #{tpu_custom_call.1} parent=1 // pred_check
      _
    $region19: #{tpu_custom_call.1} parent=1 // pred_check_branch
      %40 = sbr.rel (0) target = $region21
    $region20: #{tpu_custom_call.1} parent=1 // pred_region
      %42 = dma.done [#allocation6], 16
    $region21: #{tpu_custom_call.1} parent=1 // pred_fallthru
      _
    %v43 = vlaneseq
    %v44 = vshrl.u32 %v43, 7
    %s45 = smul.u32 0, 8
    %v46 = vstv %s45
    %v47 = vadd.s32 %v44, %v46
    %v48 = vmul.u32 %v47, 4
    %v49 = vld [vmem:[#allocation2] sm:$0x1]
    %v50 = vperm.slane %v49, 0
    %v51 = vadd.s32 %v48, %v50
    %v52 = vcvt.s32.f32 %v51
    %v53 = vld [vmem:[#allocation5] sm:$0x1]
    %v55 = vperm.slane %v53, 0
    %v57 = vmul.f32 %v52, %v55
    %v58 = vld [vmem:[%s2] sm:$0x1]
    %v60 = vperm.slane %v58, 0
    %v62 = vadd.f32 %v57, %v60
    %v63 = vand.u32 2147483647, %v62
    %vm64 = vcmp.le.f32.partialorder %v63, 0.7853982
    %vm65 = vcmp.lt.s32.totalorder %v62, 0
    %v66 = vand.u32 %v62, 2139095040
    %v67 = vshrl.u32 %v66, 23
    %v68 = vsub.s32 %v67, 127
    %v69 = vand.u32 2147483647, %v62
    %v70 = vand.u32 %v69, 8388607
    %v71 = vor.u32 %v70, 8388608
    %v72 = vsub.s32 0, %v71
    %v73 = vadd.s32 %v68, 1
    %vm74 = vcmp.gt.s32.totalorder %v73, 0
    %v75 = vsel %vm74, %v73, 0
    %v76 = vshrl.u32 %v75, 5
    %v77 = vand.u32 %v75, 31
    %v78 = vsub.s32 32, %v77
    %v79 = vshrl.u32 683565275, %v78
    %v80 = vshll.u32 683565275, %v77
    %v81 = vshrl.u32 2475754826, %v78
    %v82 = vor.u32 %v80, %v81
    %v83 = vshll.u32 2475754826, %v77
    %v84 = vshrl.u32 2131351028, %v78
    %v85 = vor.u32 %v83, %v84
    %v86 = vshll.u32 2131351028, %v77
    %v87 = vshrl.u32 2102212464, %v78
    %v88 = vor.u32 %v86, %v87
    %v89 = vshll.u32 2102212464, %v77
    %v90 = vshrl.u32 920167782, %v78
    %v91 = vor.u32 %v89, %v90
    %v92 = vshll.u32 920167782, %v77
    %v93 = vshrl.u32 1326507024, %v78
    %v94 = vor.u32 %v92, %v93
    %vm95 = vcmp.lt.s32.totalorder %v76, 1
    %vm96 = vcmp.lt.s32.totalorder %v76, 2
    %vm97 = vcmp.lt.s32.totalorder %v76, 3
    %vm98 = vcmp.lt.s32.totalorder %v76, 4
    %v99 = vsel %vm95, %v79, %v82
    %v100 = vsel %vm98, %v88, 2102212464
    %v101 = vsel %vm97, %v85, %v100
    %v102 = vsel %vm96, %v99, %v101
    %v103 = vsel %vm95, %v82, %v85
    %v104 = vsel %vm98, %v91, 920167782
    %v105 = vsel %vm97, %v88, %v104
    %v106 = vsel %vm96, %v103, %v105
    %v107 = vsel %vm95, %v85, %v88
    %v108 = vsel %vm98, %v94, 1326507024
    %v109 = vsel %vm97, %v91, %v108
    %v110 = vsel %vm96, %v107, %v109
    %v111 = vshll.u32 %v71, 8
    %v112 = vand.u32 %v111, 65535
    %v113 = vshrl.u32 %v111, 16
    %v114 = vand.u32 %v110, 65535
    %v115 = vshrl.u32 %v110, 16
    %v116 = vmul.u32 %v112, %v114
    %v117 = vmul.u32 %v112, %v115
    %v118 = vmul.u32 %v113, %v114
    %v119 = vmul.u32 %v113, %v115
    %v120 = vshll.u32 %v117, 16
    %v121 = vshrl.u32 %v117, 16
    %v122 = vshll.u32 %v118, 16
    %v123 = vshrl.u32 %v118, 16
    %vm124 = vc.u32 %v116, %v120
    %v125 = vsel %vm124, 1, 0
    %v126 = vadd.s32 %v116, %v120
    %v127 = vadd.s32 %v119, %v125
    %vm128 = vc.u32 %v126, %v122
    %v129 = vsel %vm128, 1, 0
    %v130 = vadd.s32 %v126, %v122
    %v131 = vadd.s32 %v127, %v129
    %v132 = vadd.s32 %v131, %v121
    %v133 = vadd.s32 %v132, %v123
    %v134 = vand.u32 %v111, 65535
    %v135 = vshrl.u32 %v111, 16
    %v136 = vand.u32 %v106, 65535
    %v137 = vshrl.u32 %v106, 16
    %v138 = vmul.u32 %v134, %v136
    %v139 = vmul.u32 %v134, %v137
    %v140 = vmul.u32 %v135, %v136
    %v141 = vmul.u32 %v135, %v137
    %v142 = vshll.u32 %v139, 16
    %v143 = vshrl.u32 %v139, 16
    %v144 = vshll.u32 %v140, 16
    %v145 = vshrl.u32 %v140, 16
    %vm146 = vc.u32 %v138, %v142
    %v147 = vsel %vm146, 1, 0
    %v148 = vadd.s32 %v138, %v142
    %v149 = vadd.s32 %v141, %v147
    %vm150 = vc.u32 %v148, %v144
    %v151 = vsel %vm150, 1, 0
    %v152 = vadd.s32 %v148, %v144
    %v153 = vadd.s32 %v149, %v151
    %v154 = vadd.s32 %v153, %v143
    %v155 = vadd.s32 %v154, %v145
    %v156 = vmul.u32 %v111, %v102
    %v157 = vadd.s32 %v133, %v152
    %vm158 = vc.u32 %v133, %v152
    %v159 = vadd.s32 %v155, 1
    %v160 = vsel %vm158, %v159, %v155
    %v161 = vadd.s32 %v156, %v160
    %v162 = vadd.s32 %v161, 536870912
    %v163 = vshrl.u32 %v162, 30
    %v164 = vshll.u32 %v163, 30
    %v165 = vsub.s32 %v161, %v164
    %vm166 = vcmp.lt.s32.totalorder %v165, 0
    %v167 = vsub.s32 0, %v165
    %v168 = vsel %vm166, %v167, %v165
    %v169 = vclz %v168
    %v170 = vsub.s32 %v169, 2
    %vm171 = vcmp.gt.s32.totalorder 0, %v170
    %v172 = vsel %vm171, 0, %v170
    %v173 = vsub.s32 32, %v172
    %v174 = vshll.u32 %v165, %v172
    %v175 = vshrl.u32 %v157, %v173
    %v176 = vor.u32 %v174, %v175
    %v177 = vsub.s32 4294967266, %v172
    %v178 = vadd.s32 %v177, 127
    %v179 = vshll.u32 %v178, 23
    %v180 = vor.u32 4788187, %v179
    %v181 = vand.u32 2147483647, %v180
    %v183 = vcvt.s32.f32 %v176
    %v184 = vmul.f32 %v183, %v181
    %v185 = vxor.u32 %v184, 2147483648
    %v186 = vsel %vm65, %v185, %v184
    %v187 = vsub.s32 4, %v163
    %v188 = vsel %vm65, %v187, %v163
    %v189 = vsel %vm64, %v62, %v186
    %v190 = vsel %vm64, 0, %v188
    %v191 = vmul.f32 %v189, %v189
    %v192 = vmul.f32 %v191, -0.001358992
    %v193 = vadd.f32 %v192, 0.041655596
    %v194 = vmul.f32 %v191, %v193
    %v195 = vadd.f32 %v194, -0.4999988
    %v196 = vmul.f32 %v191, %v195
    %v197 = vadd.f32 1.0, %v196
    %v198 = vmul.f32 %v189, %v189
    %v199 = vmul.f32 %v198, -0.00019511016
    %v200 = vadd.f32 %v199, 0.008332121
    %v201 = vmul.f32 %v198, %v200
    %v202 = vadd.f32 %v201, -0.16666654
    %v203 = vmul.f32 %v198, %v202
    %v204 = vadd.f32 %v203, 1.0
    %v205 = vmul.f32 %v204, %v189
    %vm206 = vweird.f32 %v62
    %v207 = vand.u32 %v190, 3
    %vm208 = vcmp.lt.s32.totalorder %v207, 2
    %vm209 = vcmp.eq.s32.totalorder %v207, 0
    %v210 = vxor.u32 %v205, 2147483648
    %v211 = vsel %vm209, %v197, %v210
    %vm212 = vcmp.eq.s32.totalorder %v207, 2
    %v213 = vxor.u32 %v197, 2147483648
    %v214 = vsel %vm212, %v213, %v205
    %v215 = vsel %vm208, %v211, %v214
    %v216 = vsel %vm206, nan, %v215
    %217 = vst [vmem:[#allocation7] sm:$0xff] %v216
    // Predicated region
    $region22: #{tpu_custom_call.1} parent=1 // pred_check
      _
    $region23: #{tpu_custom_call.1} parent=1 // pred_check_branch
      %219 = sbr.rel (0) target = $region25
    $region24: #{tpu_custom_call.1} parent=1 // pred_region
      %221 = vsyncadd [#allocation4], 0
      %s223 = sshll.u32 [#allocation7], 4
      %s224 = int_to_ptr.vmem [resolvable:$true] %s223
      %s225 = sshll.u32 %s3, 4
      %s226 = int_to_ptr.hbm [resolvable:$true] %s225
      %228 = dma.vmem_to_hbm [thread:$0]  %s224, 128, %s226, [#allocation4]
    $region25: #{tpu_custom_call.1} parent=1 // pred_fallthru
      _
    // Predicated region
    $region26: #{tpu_custom_call.1} parent=1 // pred_check
      _
    $region27: #{tpu_custom_call.1} parent=1 // pred_check_branch
      %230 = sbr.rel (0) target = $region29
    $region28: #{tpu_custom_call.1} parent=1 // pred_region
      %232 = dma.done [#allocation4], 128
    $region29: #{tpu_custom_call.1} parent=1 // pred_fallthru
      _
    %233 = vsyncpa [#allocation3], 1
    %234 = vsyncpa [#allocation6], 1
    %235 = vsyncpa [#allocation4], 1

</llo_original>
